<compile_context>
chip_gen: v7x
topology: tpu7x:2x2x1
jax: 0.10.0
libtpu: 0.0.40
codegen_flags: <defaults>
</compile_context>

<pallas_src>
import functools

import jax
import jax.numpy as jnp
from jax.experimental import pallas as pl
from jax.experimental.pallas import tpu as pltpu

LEAKY_SLOPE = 0.2
BN_EPS = 1e-5
H1, H2, H3 = 512, 256, 128
OUT_PAD = 128  # layer-4 weight lane-padded for the MXU; HBM output stays [*, 1]


def _leaky(x):
    # max(x, slope*x) == LeakyReLU(slope) for 0 < slope < 1.
    return jnp.maximum(x, LEAKY_SLOPE * x)


def _round_up(n, m):
    return ((n + m - 1) // m) * m


def _cdiv(a, b):
    return (a + b - 1) // b


def _use_bf16_epilogue():
    # bf16 VALUs exist on v6e/v7x; v5e (and older) keep the f32 fast path.
    try:
        kind = jax.devices()[0].device_kind.lower()
    except Exception:
        return True
    return ("v6" in kind) or ("v7" in kind)


# -----------------------------------------------------------------------------
# Fused kernel: 4 x (matmul + bias + LeakyReLU), one M-tile per grid step
# -----------------------------------------------------------------------------
def _discriminator_kernel(x_ref, w1_ref, b1_ref, w2_ref, b2_ref,
                          w3_ref, b3_ref, w4_ref, b4_ref, o_ref, *,
                          bf16_act):
    def hidden(acc_f32, b_ref):
        h = acc_f32 + b_ref[...]                    # bias / folded-BN in f32
        if bf16_act:
            return _leaky(h.astype(jnp.bfloat16))   # bf16 activation (v6e/v7x)
        return _leaky(h).astype(jnp.bfloat16)       # f32 activation (v5e)

    # Layer 1: Linear(z_dim -> 512, bias=True) + LeakyReLU
    h = hidden(jnp.dot(x_ref[...], w1_ref[...],
                       preferred_element_type=jnp.float32), b1_ref)
    # Layer 2: Linear(512 -> 256, bias=False) + BatchNorm(folded) + LeakyReLU
    h = hidden(jnp.dot(h, w2_ref[...], preferred_element_type=jnp.float32),
               b2_ref)
    # Layer 3: Linear(256 -> 128, bias=False) + BatchNorm(folded) + LeakyReLU
    h = hidden(jnp.dot(h, w3_ref[...], preferred_element_type=jnp.float32),
               b3_ref)
    # Layer 4: Linear(128 -> 1, bias=True) + LeakyReLU.  Weight is padded to
    # 128 MXU lanes (free on the MXU); only column 0 is written back to HBM.
    h4 = jnp.dot(h, w4_ref[...], preferred_element_type=jnp.float32) + b4_ref[...]
    o_ref[...] = _leaky(h4)[:, :1].astype(o_ref.dtype)


def _choose_tile_m(batch, tile_m):
    tm = min(tile_m, _round_up(batch, 8))
    # Keep >= 2 grid steps for big batches so the "parallel" M axis can shard
    # across v7x's two TensorCores (no effect on tiny batches).
    if tm >= 512 and batch <= tm:
        tm = max(256, _round_up(_cdiv(batch, 2), 256))
    # Re-balance the tile so batch-padding waste stays small for ragged B.
    steps = _cdiv(batch, tm)
    quantum = 256 if tm >= 256 else 8
    tm = min(tm, _round_up(_cdiv(batch, steps), quantum))
    return max(8, tm)


def discriminator_forward(x, kparams, *, tile_m=2048):
    """x: [B, z_dim] float -> [B, 1] float32 (eval-mode BatchNorm)."""
    B, zdim = x.shape
    w1, b1, w2, b2, w3, b3, w4, b4 = kparams

    tm = _choose_tile_m(B, tile_m)
    Bp = _round_up(B, tm)
    if Bp != B:
        x = jnp.pad(x, ((0, Bp - B), (0, 0)))
    xb = x.astype(jnp.bfloat16)

    grid = (Bp // tm,)

    def full(shape):
        # Constant index map -> block DMA'd once, resident across the grid.
        return pl.BlockSpec(shape, lambda i: (0, 0))

    flops = 2 * Bp * (zdim * H1 + H1 * H2 + H2 * H3 + H3 * 1)
    bytes_accessed = (
        xb.size * 2
        + sum(int(w.size) * 2 for w in (w1, w2, w3, w4))
        + sum(int(b.size) * 4 for b in (b1, b2, b3, b4))
        + Bp * 4
    )

    kernel = functools.partial(_discriminator_kernel,
                               bf16_act=_use_bf16_epilogue())

    out = pl.pallas_call(
        kernel,
        out_shape=jax.ShapeDtypeStruct((Bp, 1), jnp.float32),
        grid=grid,
        in_specs=[
            pl.BlockSpec((tm, zdim), lambda i: (i, 0)),   # x tile
            full((zdim, H1)), full((1, H1)),              # layer 1
            full((H1, H2)), full((1, H2)),                # layer 2 (BN folded)
            full((H2, H3)), full((1, H3)),                # layer 3 (BN folded)
            full((H3, OUT_PAD)), full((1, OUT_PAD)),      # layer 4 (lane-padded)
        ],
        out_specs=pl.BlockSpec((tm, 1), lambda i: (i, 0)),
        compiler_params=pltpu.CompilerParams(
            dimension_semantics=("parallel",),
            vmem_limit_bytes=32 * 1024 * 1024,
        ),
        cost_estimate=pl.CostEstimate(
            flops=flops, transcendentals=0, bytes_accessed=bytes_accessed),
    )(xb, w1, b1, w2, b2, w3, b3, w4, b4)

    return out[:B]


# -----------------------------------------------------------------------------
# Parameter construction (mirrors Discriminator.__init__ shapes) + BN folding
# -----------------------------------------------------------------------------
def init_params(key, z_dim=10):
    p = {}
    key, k1, k1b = jax.random.split(key, 3)
    p["W1"] = 0.02 * jax.random.normal(k1, (H1, z_dim), jnp.float32)
    p["b1"] = 0.1 * jax.random.normal(k1b, (H1,), jnp.float32)

    for name, (cout, cin) in (("2", (H2, H1)), ("3", (H3, H2))):
        key, kw, kg, kb, km, kv = jax.random.split(key, 6)
        p["W" + name] = 0.02 * jax.random.normal(kw, (cout, cin), jnp.float32)
        p["gamma" + name] = 1.0 + 0.1 * jax.random.normal(kg, (cout,), jnp.float32)
        p["beta" + name] = 0.1 * jax.random.normal(kb, (cout,), jnp.float32)
        p["rmean" + name] = 0.1 * jax.random.normal(km, (cout,), jnp.float32)
        p["rvar" + name] = 0.5 + jax.random.uniform(kv, (cout,), jnp.float32)

    key, k4, k4b = jax.random.split(key, 3)
    p["W4"] = 0.02 * jax.random.normal(k4, (1, H3), jnp.float32)
    p["b4"] = 0.1 * jax.random.normal(k4b, (1,), jnp.float32)
    return p


def prepare_kernel_params(p):
    """Fold BN into weights, transpose to x@W form, pad the last layer, cast."""
    def fold(gamma, beta, rmean, rvar):
        scale = gamma / jnp.sqrt(rvar + BN_EPS)
        return scale, beta - rmean * scale

    w1 = p["W1"].T                                   # [z_dim, 512]
    b1 = p["b1"].reshape(1, H1)

    s2, bb2 = fold(p["gamma2"], p["beta2"], p["rmean2"], p["rvar2"])
    w2 = (p["W2"] * s2[:, None]).T                   # [512, 256]
    b2 = bb2.reshape(1, H2)

    s3, bb3 = fold(p["gamma3"], p["beta3"], p["rmean3"], p["rvar3"])
    w3 = (p["W3"] * s3[:, None]).T                   # [256, 128]
    b3 = bb3.reshape(1, H3)

    w4 = jnp.zeros((H3, OUT_PAD), jnp.float32).at[:, :1].set(p["W4"].T)
    b4 = jnp.zeros((1, OUT_PAD), jnp.float32).at[:, :1].set(p["b4"].reshape(1, 1))

    bf = jnp.bfloat16
    return (w1.astype(bf), b1.astype(jnp.float32),
            w2.astype(bf), b2.astype(jnp.float32),
            w3.astype(bf), b3.astype(jnp.float32),
            w4.astype(bf), b4.astype(jnp.float32))


# -----------------------------------------------------------------------------
# Pure-JAX f32 reference (eval-mode BN), for a sanity check
# -----------------------------------------------------------------------------
def reference_forward(x, p):
    h = _leaky(x @ p["W1"].T + p["b1"])
    h = h @ p["W2"].T
    h = (h - p["rmean2"]) / jnp.sqrt(p["rvar2"] + BN_EPS) * p["gamma2"] + p["beta2"]
    h = _leaky(h)
    h = h @ p["W3"].T
    h = (h - p["rmean3"]) / jnp.sqrt(p["rvar3"] + BN_EPS) * p["gamma3"] + p["beta3"]
    h = _leaky(h)
    h = _leaky(h @ p["W4"].T + p["b4"])
    return h


if __name__ == "__main__":
    Z_DIM = 10
    BATCH = 8

    key = jax.random.PRNGKey(0)
    key, kx = jax.random.split(key)
    params = init_params(key, z_dim=Z_DIM)
    kparams = prepare_kernel_params(params)

    x = jax.random.normal(kx, (BATCH, Z_DIM), jnp.float32)

    out = discriminator_forward(x, kparams)
    out = jax.block_until_ready(out)

    assert out.shape == (BATCH, 1), out.shape
    assert bool(jnp.all(jnp.isfinite(out)))

    ref = reference_forward(x, params)
    max_err = float(jnp.max(jnp.abs(out - ref)))
    assert max_err < 5e-2, f"mismatch vs reference: {max_err}"

    print("KERNEL_OK")
</pallas_src>

<mosaic_0001>
module attributes {stable_mosaic.version = 11 : i64} {
  func.func @_discriminator_kernel(%arg0: i32, %arg1: memref<8x10xbf16, #tpu.memory_space<vmem>>, %arg2: memref<10x512xbf16, #tpu.memory_space<vmem>>, %arg3: memref<1x512xf32, #tpu.memory_space<vmem>>, %arg4: memref<512x256xbf16, #tpu.memory_space<vmem>>, %arg5: memref<1x256xf32, #tpu.memory_space<vmem>>, %arg6: memref<256x128xbf16, #tpu.memory_space<vmem>>, %arg7: memref<1x128xf32, #tpu.memory_space<vmem>>, %arg8: memref<128x128xbf16, #tpu.memory_space<vmem>>, %arg9: memref<1x128xf32, #tpu.memory_space<vmem>>, %arg10: memref<8x1xf32, #tpu.memory_space<vmem>>) attributes {dimension_semantics = [#tpu.dimension_semantics<parallel>], iteration_bounds = array<i64: 1>, scalar_prefetch = 0 : i64, scratch_operands = 0 : i64, tpu.core_type = #tpu.core_type<tc>, window_params = [{transform_indices = @transform_0, window_bounds = array<i64: 8, 10>}, {pipeline_mode = #tpu.pipeline_mode<synchronous>, transform_indices = @transform_1, window_bounds = array<i64: 10, 512>}, {pipeline_mode = #tpu.pipeline_mode<synchronous>, transform_indices = @transform_2, window_bounds = array<i64: 1, 512>}, {pipeline_mode = #tpu.pipeline_mode<synchronous>, transform_indices = @transform_3, window_bounds = array<i64: 512, 256>}, {pipeline_mode = #tpu.pipeline_mode<synchronous>, transform_indices = @transform_4, window_bounds = array<i64: 1, 256>}, {pipeline_mode = #tpu.pipeline_mode<synchronous>, transform_indices = @transform_5, window_bounds = array<i64: 256, 128>}, {pipeline_mode = #tpu.pipeline_mode<synchronous>, transform_indices = @transform_6, window_bounds = array<i64: 1, 128>}, {pipeline_mode = #tpu.pipeline_mode<synchronous>, transform_indices = @transform_7, window_bounds = array<i64: 128, 128>}, {pipeline_mode = #tpu.pipeline_mode<synchronous>, transform_indices = @transform_8, window_bounds = array<i64: 1, 128>}, {transform_indices = @transform_9, window_bounds = array<i64: 8, 1>}]} {
    %c0 = arith.constant 0 : index
    %c0_0 = arith.constant 0 : index
    %0 = vector.load %arg1[%c0, %c0_0] : memref<8x10xbf16, #tpu.memory_space<vmem>>, vector<8x10xbf16>
    %c0_1 = arith.constant 0 : index
    %c0_2 = arith.constant 0 : index
    %1 = vector.load %arg2[%c0_1, %c0_2] : memref<10x512xbf16, #tpu.memory_space<vmem>>, vector<10x512xbf16>
    %cst = arith.constant dense<0.000000e+00> : vector<8x512xf32>
    %2 = tpu.matmul %0, %1, %cst {dimension_numbers = #tpu.dot_dimension_numbers<[1], [0], [0], [1], [0, 0, 1, 1], [], []>} : vector<8x10xbf16>, vector<10x512xbf16>, vector<8x512xf32> -> vector<8x512xf32>
    %c0_3 = arith.constant 0 : index
    %c0_4 = arith.constant 0 : index
    %3 = vector.load %arg3[%c0_3, %c0_4] : memref<1x512xf32, #tpu.memory_space<vmem>>, vector<1x512xf32>
    %4 = vector.broadcast %3 : vector<1x512xf32> to vector<8x512xf32>
    %5 = arith.addf %2, %4 : vector<8x512xf32>
    %cst_5 = arith.constant 2.000000e-01 : f32
    %6 = vector.broadcast %cst_5 : f32 to vector<8x512xf32>
    %7 = arith.mulf %6, %5 : vector<8x512xf32>
    %8 = arith.maximumf %5, %7 : vector<8x512xf32>
    %9 = arith.truncf %8 : vector<8x512xf32> to vector<8x512xbf16>
    %c0_6 = arith.constant 0 : index
    %c0_7 = arith.constant 0 : index
    %10 = vector.load %arg4[%c0_6, %c0_7] : memref<512x256xbf16, #tpu.memory_space<vmem>>, vector<512x256xbf16>
    %cst_8 = arith.constant dense<0.000000e+00> : vector<8x256xf32>
    %11 = tpu.matmul %9, %10, %cst_8 {dimension_numbers = #tpu.dot_dimension_numbers<[1], [0], [0], [1], [0, 0, 1, 1], [], []>} : vector<8x512xbf16>, vector<512x256xbf16>, vector<8x256xf32> -> vector<8x256xf32>
    %c0_9 = arith.constant 0 : index
    %c0_10 = arith.constant 0 : index
    %12 = vector.load %arg5[%c0_9, %c0_10] : memref<1x256xf32, #tpu.memory_space<vmem>>, vector<1x256xf32>
    %13 = vector.broadcast %12 : vector<1x256xf32> to vector<8x256xf32>
    %14 = arith.addf %11, %13 : vector<8x256xf32>
    %cst_11 = arith.constant 2.000000e-01 : f32
    %15 = vector.broadcast %cst_11 : f32 to vector<8x256xf32>
    %16 = arith.mulf %15, %14 : vector<8x256xf32>
    %17 = arith.maximumf %14, %16 : vector<8x256xf32>
    %18 = arith.truncf %17 : vector<8x256xf32> to vector<8x256xbf16>
    %c0_12 = arith.constant 0 : index
    %c0_13 = arith.constant 0 : index
    %19 = vector.load %arg6[%c0_12, %c0_13] : memref<256x128xbf16, #tpu.memory_space<vmem>>, vector<256x128xbf16>
    %cst_14 = arith.constant dense<0.000000e+00> : vector<8x128xf32>
    %20 = tpu.matmul %18, %19, %cst_14 {dimension_numbers = #tpu.dot_dimension_numbers<[1], [0], [0], [1], [0, 0, 1, 1], [], []>} : vector<8x256xbf16>, vector<256x128xbf16>, vector<8x128xf32> -> vector<8x128xf32>
    %c0_15 = arith.constant 0 : index
    %c0_16 = arith.constant 0 : index
    %21 = vector.load %arg7[%c0_15, %c0_16] : memref<1x128xf32, #tpu.memory_space<vmem>>, vector<1x128xf32>
    %22 = vector.broadcast %21 : vector<1x128xf32> to vector<8x128xf32>
    %23 = arith.addf %20, %22 : vector<8x128xf32>
    %cst_17 = arith.constant 2.000000e-01 : f32
    %24 = vector.broadcast %cst_17 : f32 to vector<8x128xf32>
    %25 = arith.mulf %24, %23 : vector<8x128xf32>
    %26 = arith.maximumf %23, %25 : vector<8x128xf32>
    %27 = arith.truncf %26 : vector<8x128xf32> to vector<8x128xbf16>
    %c0_18 = arith.constant 0 : index
    %c0_19 = arith.constant 0 : index
    %28 = vector.load %arg8[%c0_18, %c0_19] : memref<128x128xbf16, #tpu.memory_space<vmem>>, vector<128x128xbf16>
    %cst_20 = arith.constant dense<0.000000e+00> : vector<8x128xf32>
    %29 = tpu.matmul %27, %28, %cst_20 {dimension_numbers = #tpu.dot_dimension_numbers<[1], [0], [0], [1], [0, 0, 1, 1], [], []>} : vector<8x128xbf16>, vector<128x128xbf16>, vector<8x128xf32> -> vector<8x128xf32>
    %c0_21 = arith.constant 0 : index
    %c0_22 = arith.constant 0 : index
    %30 = vector.load %arg9[%c0_21, %c0_22] : memref<1x128xf32, #tpu.memory_space<vmem>>, vector<1x128xf32>
    %31 = vector.broadcast %30 : vector<1x128xf32> to vector<8x128xf32>
    %32 = arith.addf %29, %31 : vector<8x128xf32>
    %cst_23 = arith.constant 2.000000e-01 : f32
    %33 = vector.broadcast %cst_23 : f32 to vector<8x128xf32>
    %34 = arith.mulf %33, %32 : vector<8x128xf32>
    %35 = arith.maximumf %32, %34 : vector<8x128xf32>
    %36 = vector.extract_strided_slice %35 {offsets = [0, 0], sizes = [8, 1], strides = [1, 1]} : vector<8x128xf32> to vector<8x1xf32>
    %c0_24 = arith.constant 0 : index
    %c0_25 = arith.constant 0 : index
    %37 = vector.load %arg10[%c0_24, %c0_25] : memref<8x1xf32, #tpu.memory_space<vmem>>, vector<8x1xf32>
    tpu.vector_store %arg10[%c0_24, %c0_25], %36 {strides = array<i32>} : memref<8x1xf32, #tpu.memory_space<vmem>>, vector<8x1xf32>,
    return
  }
  func.func @transform_0(%arg0: i32) -> (i32, i32) {
    %c0_i32 = arith.constant 0 : i32
    %c0_i32_0 = arith.constant 0 : i32
    return %arg0, %c0_i32 : i32, i32
  }
  func.func @transform_1(%arg0: i32) -> (i32, i32) {
    %c0_i32 = arith.constant 0 : i32
    %c0_i32_0 = arith.constant 0 : i32
    %c0_i32_1 = arith.constant 0 : i32
    return %c0_i32, %c0_i32_0 : i32, i32
  }
  func.func @transform_2(%arg0: i32) -> (i32, i32) {
    %c0_i32 = arith.constant 0 : i32
    %c0_i32_0 = arith.constant 0 : i32
    %c0_i32_1 = arith.constant 0 : i32
    return %c0_i32, %c0_i32_0 : i32, i32
  }
  func.func @transform_3(%arg0: i32) -> (i32, i32) {
    %c0_i32 = arith.constant 0 : i32
    %c0_i32_0 = arith.constant 0 : i32
    %c0_i32_1 = arith.constant 0 : i32
    return %c0_i32, %c0_i32_0 : i32, i32
  }
  func.func @transform_4(%arg0: i32) -> (i32, i32) {
    %c0_i32 = arith.constant 0 : i32
    %c0_i32_0 = arith.constant 0 : i32
    %c0_i32_1 = arith.constant 0 : i32
    return %c0_i32, %c0_i32_0 : i32, i32
  }
  func.func @transform_5(%arg0: i32) -> (i32, i32) {
    %c0_i32 = arith.constant 0 : i32
    %c0_i32_0 = arith.constant 0 : i32
    %c0_i32_1 = arith.constant 0 : i32
    return %c0_i32, %c0_i32_0 : i32, i32
  }
  func.func @transform_6(%arg0: i32) -> (i32, i32) {
    %c0_i32 = arith.constant 0 : i32
    %c0_i32_0 = arith.constant 0 : i32
    %c0_i32_1 = arith.constant 0 : i32
    return %c0_i32, %c0_i32_0 : i32, i32
  }
  func.func @transform_7(%arg0: i32) -> (i32, i32) {
    %c0_i32 = arith.constant 0 : i32
    %c0_i32_0 = arith.constant 0 : i32
    %c0_i32_1 = arith.constant 0 : i32
    return %c0_i32, %c0_i32_0 : i32, i32
  }
  func.func @transform_8(%arg0: i32) -> (i32, i32) {
    %c0_i32 = arith.constant 0 : i32
    %c0_i32_0 = arith.constant 0 : i32
    %c0_i32_1 = arith.constant 0 : i32
    return %c0_i32, %c0_i32_0 : i32, i32
  }
  func.func @transform_9(%arg0: i32) -> (i32, i32) {
    %c0_i32 = arith.constant 0 : i32
    %c0_i32_0 = arith.constant 0 : i32
    return %arg0, %c0_i32 : i32, i32
  }
}

</mosaic_0001>

<llo_original>
// kernel: tpu_custom_call.1
$region0: #{tpu_custom_call.1}
  #allocation0 [shape = 'u32[]', space=smem, size = 0x4, offset = 0x4, fixed_abs, tag = 'smem constant byte address 0x4 - core index']
  #allocation1 [shape = 'u32[144,128]{1,0:T(1,128)}', space=vmem, size = 0x12000, scoped, tag = 'internal scratch']
  %s0 = inlined_call_operand.hbm [shape: bf16[8,10], index: 0, kind: input, shape index: {}]
  %s1 = inlined_call_operand.hbm [shape: bf16[10,512], index: 1, kind: input, shape index: {}]
  %s2 = inlined_call_operand.vmem [shape: f32[1,512], index: 2, kind: input, shape index: {}]
  %s3 = inlined_call_operand.hbm [shape: bf16[512,256], index: 3, kind: input, shape index: {}]
  %s4 = inlined_call_operand.vmem [shape: f32[1,256], index: 4, kind: input, shape index: {}]
  %s5 = inlined_call_operand.hbm [shape: bf16[256,128], index: 5, kind: input, shape index: {}]
  %s6 = inlined_call_operand.vmem [shape: f32[1,128], index: 6, kind: input, shape index: {}]
  %s7 = inlined_call_operand.hbm [shape: bf16[128,128], index: 7, kind: input, shape index: {}]
  %s8 = inlined_call_operand.vmem [shape: f32[1,128], index: 8, kind: input, shape index: {}]
  %s9 = inlined_call_operand.vmem [shape: f32[8,1], index: 9, kind: output, shape index: {}]
  %s10 = sld [smem:[#allocation0]]
  $region66: #{tpu_custom_call.1} parent=0
    _
  %s12 = ssub.s32 1, %s10
  %s13 = scalar_select 0, %s12, %s10
  $region1: #{tpu_custom_call.1} parent=0
    #allocation2 [shape = 'u8[2048]{0}', space=vmem, size = 0x800, scoped, tag = 'input window, operand 0, single buffered']
    #allocation3 [shape = 's32[1]{0}', space=sflag, size = 0x4, scoped, tag = 'scoped memory for tpu_custom_call.1']
    #allocation4 [shape = 'u8[16384]{0}', space=vmem, size = 0x4000, scoped, tag = 'input window, operand 1, single buffered']
    #allocation5 [shape = 's32[1]{0}', space=sflag, size = 0x4, scoped, tag = 'scoped memory for tpu_custom_call.1']
    #allocation6 [shape = 'u8[262144]{0}', space=vmem, size = 0x40000, scoped, tag = 'input window, operand 3, single buffered']
    #allocation7 [shape = 'u8[65536]{0}', space=vmem, size = 0x10000, scoped, tag = 'input window, operand 5, single buffered']
    #allocation8 [shape = 's32[1]{0}', space=sflag, size = 0x4, scoped, tag = 'scoped memory for tpu_custom_call.1']
    #allocation9 [shape = 'u8[32768]{0}', space=vmem, size = 0x8000, scoped, tag = 'input window, operand 7, single buffered']
    %14 = vsyncpa [#allocation3], 0
    %15 = vsyncpa [#allocation5], 0
    %16 = vsyncpa [#allocation8], 0
    // Predicated region
    $region2: #{tpu_custom_call.1} parent=1 // pred_check
      _
    $region3: #{tpu_custom_call.1} parent=1 // pred_check_branch
      %18 = sbr.rel (0) target = $region5
    $region4: #{tpu_custom_call.1} parent=1 // pred_region
      %s20 = ssub.s32 64, 64
      %21 = vsyncadd [#allocation3], %s20
      %s23 = sshll.u32 [#allocation2], 4
      %s24 = int_to_ptr.vmem [resolvable:$true] %s23
      %26 = dma.hbm_to_vmem [thread:$0]  %s0, 64, %s24, [#allocation3]
    $region5: #{tpu_custom_call.1} parent=1 // pred_fallthru
      _
    // Predicated region
    $region6: #{tpu_custom_call.1} parent=1 // pred_check
      _
    $region7: #{tpu_custom_call.1} parent=1 // pred_check_branch
      %28 = sbr.rel (0) target = $region9
    $region8: #{tpu_custom_call.1} parent=1 // pred_region
      %s30 = ssub.s32 512, 512
      %31 = vsyncadd [#allocation5], %s30
      %s32 = sshll.u32 [#allocation4], 4
      %s33 = int_to_ptr.vmem [resolvable:$true] %s32
      %38 = dma.hbm_to_vmem [thread:$0]  %s1, 512, %s33, [#allocation5], 256, 256, 16
    $region9: #{tpu_custom_call.1} parent=1 // pred_fallthru
      _
    // Predicated region
    $region10: #{tpu_custom_call.1} parent=1 // pred_check
      _
    $region11: #{tpu_custom_call.1} parent=1 // pred_check_branch
      %40 = sbr.rel (0) target = $region13
    $region12: #{tpu_custom_call.1} parent=1 // pred_region
      _
    $region13: #{tpu_custom_call.1} parent=1 // pred_fallthru
      _
    // Predicated region
    $region14: #{tpu_custom_call.1} parent=1 // pred_check
      _
    $region15: #{tpu_custom_call.1} parent=1 // pred_check_branch
      %42 = sbr.rel (0) target = $region17
    $region16: #{tpu_custom_call.1} parent=1 // pred_region
      %s44 = ssub.s32 8192, 8192
      %45 = vsyncadd [#allocation5], %s44
      %s46 = sshll.u32 [#allocation6], 4
      %s47 = int_to_ptr.vmem [resolvable:$true] %s46
      %52 = dma.hbm_to_vmem [thread:$0]  %s3, 8192, %s47, [#allocation5], 128, 128, 8
    $region17: #{tpu_custom_call.1} parent=1 // pred_fallthru
      _
    // Predicated region
    $region18: #{tpu_custom_call.1} parent=1 // pred_check
      _
    $region19: #{tpu_custom_call.1} parent=1 // pred_check_branch
      %54 = sbr.rel (0) target = $region21
    $region20: #{tpu_custom_call.1} parent=1 // pred_region
      _
    $region21: #{tpu_custom_call.1} parent=1 // pred_fallthru
      _
    // Predicated region
    $region22: #{tpu_custom_call.1} parent=1 // pred_check
      _
    $region23: #{tpu_custom_call.1} parent=1 // pred_check_branch
      %56 = sbr.rel (0) target = $region25
    $region24: #{tpu_custom_call.1} parent=1 // pred_region
      %s58 = ssub.s32 2048, 2048
      %59 = vsyncadd [#allocation8], %s58
      %s60 = sshll.u32 [#allocation7], 4
      %s61 = int_to_ptr.vmem [resolvable:$true] %s60
      %66 = dma.hbm_to_vmem [thread:$0]  %s5, 2048, %s61, [#allocation8], 64, 64, 4
    $region25: #{tpu_custom_call.1} parent=1 // pred_fallthru
      _
    // Predicated region
    $region26: #{tpu_custom_call.1} parent=1 // pred_check
      _
    $region27: #{tpu_custom_call.1} parent=1 // pred_check_branch
      %68 = sbr.rel (0) target = $region29
    $region28: #{tpu_custom_call.1} parent=1 // pred_region
      _
    $region29: #{tpu_custom_call.1} parent=1 // pred_fallthru
      _
    // Predicated region
    $region30: #{tpu_custom_call.1} parent=1 // pred_check
      _
    $region31: #{tpu_custom_call.1} parent=1 // pred_check_branch
      %70 = sbr.rel (0) target = $region33
    $region32: #{tpu_custom_call.1} parent=1 // pred_region
      %s72 = ssub.s32 1024, 1024
      %73 = vsyncadd [#allocation8], %s72
      %s74 = sshll.u32 [#allocation9], 4
      %s75 = int_to_ptr.vmem [resolvable:$true] %s74
      %80 = dma.hbm_to_vmem [thread:$0]  %s7, 1024, %s75, [#allocation8], 64, 64, 4
    $region33: #{tpu_custom_call.1} parent=1 // pred_fallthru
      _
    // Predicated region
    $region34: #{tpu_custom_call.1} parent=1 // pred_check
      _
    $region35: #{tpu_custom_call.1} parent=1 // pred_check_branch
      %82 = sbr.rel (0) target = $region37
    $region36: #{tpu_custom_call.1} parent=1 // pred_region
      _
    $region37: #{tpu_custom_call.1} parent=1 // pred_fallthru
      _
    // Predicated region
    $region38: #{tpu_custom_call.1} parent=1 // pred_check
      _
    $region39: #{tpu_custom_call.1} parent=1 // pred_check_branch
      %84 = sbr.rel (0) target = $region41
    $region40: #{tpu_custom_call.1} parent=1 // pred_region
      %85 = dma.done [#allocation3], 64
    $region41: #{tpu_custom_call.1} parent=1 // pred_fallthru
      _
    // Predicated region
    $region42: #{tpu_custom_call.1} parent=1 // pred_check
      _
    $region43: #{tpu_custom_call.1} parent=1 // pred_check_branch
      %87 = sbr.rel (0) target = $region45
    $region44: #{tpu_custom_call.1} parent=1 // pred_region
      %88 = dma.done [#allocation5], 512
    $region45: #{tpu_custom_call.1} parent=1 // pred_fallthru
      _
    // Predicated region
    $region46: #{tpu_custom_call.1} parent=1 // pred_check
      _
    $region47: #{tpu_custom_call.1} parent=1 // pred_check_branch
      %90 = sbr.rel (0) target = $region49
    $region48: #{tpu_custom_call.1} parent=1 // pred_region
      %91 = dma.done [#allocation5], 8192
    $region49: #{tpu_custom_call.1} parent=1 // pred_fallthru
      _
    // Predicated region
    $region50: #{tpu_custom_call.1} parent=1 // pred_check
      _
    $region51: #{tpu_custom_call.1} parent=1 // pred_check_branch
      %93 = sbr.rel (0) target = $region53
    $region52: #{tpu_custom_call.1} parent=1 // pred_region
      %94 = dma.done [#allocation8], 2048
    $region53: #{tpu_custom_call.1} parent=1 // pred_fallthru
      _
    // Predicated region
    $region54: #{tpu_custom_call.1} parent=1 // pred_check
      _
    $region55: #{tpu_custom_call.1} parent=1 // pred_check_branch
      %96 = sbr.rel (0) target = $region57
    $region56: #{tpu_custom_call.1} parent=1 // pred_region
      %97 = dma.done [#allocation8], 1024
    $region57: #{tpu_custom_call.1} parent=1 // pred_fallthru
      _
    %v99 = vld [vmem:[#allocation2] sm:$0xf]
    %v100 = vld [vmem:[#allocation4] sm:$0xff]
    %v101 = vld [vmem:[#allocation4 + $0x8] sm:$0xff]
    %v102 = vld [vmem:[#allocation4 + $0x10] sm:$0x11]
    %v103 = vld [vmem:[#allocation4 + $0x18] sm:$0x11]
    %v104 = vld [vmem:[%s2] sm:$0xf]
    %v106 = vlaneseq
    %v107 = vshrl.u32 %v106, 7
    %v108 = vsub.s32 0, %v107
    %v109 = vrot.slane %v104, %v108
    %v110 = vlaneseq
    %v111 = vshrl.u32 %v110, 7
    %v112 = vsub.s32 1, %v111
    %v113 = vrot.slane %v104, %v112
    %v114 = vlaneseq
    %v115 = vshrl.u32 %v114, 7
    %v116 = vsub.s32 2, %v115
    %v117 = vrot.slane %v104, %v116
    %v118 = vlaneseq
    %v119 = vshrl.u32 %v118, 7
    %v120 = vsub.s32 3, %v119
    %v121 = vrot.slane %v104, %v120
    %v130 = vunpack.c.l.b16 %v100
    %v131 = vunpack.c.h.b16 %v100
    %v132 = vunpack.c.l.b16 %v101
    %v133 = vunpack.c.h.b16 %v101
    %v134 = vunpack.c.l.b16 %v102
    %v135 = vunpack.c.h.b16 %v102
    %v136 = vunpack.c.l.b16 %v103
    %v137 = vunpack.c.h.b16 %v103
    %v138 = vpack.c.b16 %v134, %v130
    %v139 = vpack.c.b16 %v135, %v131
    %v140 = vpack.c.b16 %v136, %v132
    %v141 = vpack.c.b16 %v137, %v133
    %vm142 = vcmask 80896
    %v144 = vsel %vm142, %v99, 0
    %vm146 = vcmask 1044480
    %v148 = vsel %vm146, %v138, 0
    %v151 = vsel %vm146, %v139, 0
    %v154 = vsel %vm146, %v140, 0
    %v157 = vsel %vm146, %v141, 0
    %159 = vmatprep.subr.bf16.mxu0 %v151
    %160 = vmatpush1.bf16.msra.mxu0 %v148
    %161 = vmatprep.subr.bf16.mxu0 0
    %162 = vmatpush1.bf16.msra.mxu0 0
    %163 = vmatprep.subr.bf16.mxu0 0
    %164 = vmatpush1.bf16.msra.mxu0 0
    %165 = vmatprep.subr.bf16.mxu0 0
    %166 = vmatpush1.bf16.msra.mxu0 0
    %167 = vmatprep.subr.bf16.mxu0 0
    %168 = vmatpush1.bf16.msra.mxu0 0
    %169 = vmatprep.subr.bf16.mxu0 0
    %170 = vmatpush1.bf16.msra.mxu0 0
    %171 = vmatprep.subr.bf16.mxu0 0
    %172 = vmatpush1.bf16.msra.mxu0 0
    %173 = vmatprep.subr.bf16.mxu0 0
    %174 = vmatpush1.bf16.msra.mxu0 0
    %175 = vmatprep.subr.bf16.mxu0 0
    %176 = vmatpush1.bf16.msra.mxu0 0
    %177 = vmatprep.subr.bf16.mxu0 0
    %178 = vmatpush1.bf16.msra.mxu0 0
    %179 = vmatprep.subr.bf16.mxu0 0
    %180 = vmatpush1.bf16.msra.mxu0 0
    %181 = vmatprep.subr.bf16.mxu0 0
    %182 = vmatpush1.bf16.msra.mxu0 0
    %183 = vmatprep.subr.bf16.mxu0 0
    %184 = vmatpush1.bf16.msra.mxu0 0
    %185 = vmatprep.subr.bf16.mxu0 0
    %186 = vmatpush1.bf16.msra.mxu0 0
    %187 = vmatprep.subr.bf16.mxu0 0
    %188 = vmatpush1.bf16.msra.mxu0 0
    %189 = vmatprep.subr.bf16.mxu0 0
    %190 = vmatpush1.bf16.msra.mxu0 0
    %191 = vmatprep.mubr.bf16.mxu0 0
    %192 = vmatmul.mubr.bf16.gmra.mrb[0].mxu0 %v144
    %v193 = vpop.f32.mrb[0].mxu0
    %v194 = vadd.f32 %v109, %v193
    %v195 = vpop.f32.mrb[0].mxu0
    %v196 = vadd.f32 %v113, %v195
    %v197 = vpop.f32.mrb[0].mxu0
    %v198 = vpop.f32.mrb[0].mxu0
    %199 = vdwg.mxu0
    %200 = vmatprep.subr.bf16.mxu0 %v157
    %201 = vmatpush1.bf16.msra.mxu0 %v154
    %202 = vmatprep.subr.bf16.mxu0 0
    %203 = vmatpush1.bf16.msra.mxu0 0
    %204 = vmatprep.subr.bf16.mxu0 0
    %205 = vmatpush1.bf16.msra.mxu0 0
    %206 = vmatprep.subr.bf16.mxu0 0
    %207 = vmatpush1.bf16.msra.mxu0 0
    %208 = vmatprep.subr.bf16.mxu0 0
    %209 = vmatpush1.bf16.msra.mxu0 0
    %210 = vmatprep.subr.bf16.mxu0 0
    %211 = vmatpush1.bf16.msra.mxu0 0
    %212 = vmatprep.subr.bf16.mxu0 0
    %213 = vmatpush1.bf16.msra.mxu0 0
    %214 = vmatprep.subr.bf16.mxu0 0
    %215 = vmatpush1.bf16.msra.mxu0 0
    %216 = vmatprep.subr.bf16.mxu0 0
    %217 = vmatpush1.bf16.msra.mxu0 0
    %218 = vmatprep.subr.bf16.mxu0 0
    %219 = vmatpush1.bf16.msra.mxu0 0
    %220 = vmatprep.subr.bf16.mxu0 0
    %221 = vmatpush1.bf16.msra.mxu0 0
    %222 = vmatprep.subr.bf16.mxu0 0
    %223 = vmatpush1.bf16.msra.mxu0 0
    %224 = vmatprep.subr.bf16.mxu0 0
    %225 = vmatpush1.bf16.msra.mxu0 0
    %226 = vmatprep.subr.bf16.mxu0 0
    %227 = vmatpush1.bf16.msra.mxu0 0
    %228 = vmatprep.subr.bf16.mxu0 0
    %229 = vmatpush1.bf16.msra.mxu0 0
    %230 = vmatprep.subr.bf16.mxu0 0
    %231 = vmatpush1.bf16.msra.mxu0 0
    %232 = vmatprep.mubr.bf16.mxu0 0
    %233 = vmatmul.mubr.bf16.gmra.mrb[0].mxu0 %v144
    %v234 = vpop.f32.mrb[0].mxu0
    %v235 = vadd.f32 %v117, %v234
    %v236 = vpop.f32.mrb[0].mxu0
    %v237 = vadd.f32 %v121, %v236
    %v238 = vpop.f32.mrb[0].mxu0
    %v239 = vpop.f32.mrb[0].mxu0
    %240 = vdwg.mxu0
    %v241 = vmul.f32 %v194, 0.2
    %v242 = vmul.f32 %v196, 0.2
    %v243 = vmul.f32 %v235, 0.2
    %v244 = vmul.f32 %v237, 0.2
    %v245 = vmax.f32 %v194, %v241
    %v246 = vmax.f32 %v196, %v242
    %v247 = vmax.f32 %v235, %v243
    %v248 = vmax.f32 %v237, %v244
    %v249 = vpack.c.bf16 %v245, %v245
    %v250 = vpack.c.bf16 %v246, %v246
    %v251 = vpack.c.bf16 %v247, %v247
    %v252 = vpack.c.bf16 %v248, %v248
    %v253 = vld [vmem:[#allocation6] sm:$0xff]
    %v254 = vld [vmem:[#allocation6 + $0x8] sm:$0xff]
    %v255 = vld [vmem:[#allocation6 + $0x10] sm:$0xff]
    %v256 = vld [vmem:[#allocation6 + $0x18] sm:$0xff]
    %v257 = vld [vmem:[#allocation6 + $0x20] sm:$0xff]
    %v258 = vld [vmem:[#allocation6 + $0x28] sm:$0xff]
    %v259 = vld [vmem:[#allocation6 + $0x30] sm:$0xff]
    %v260 = vld [vmem:[#allocation6 + $0x38] sm:$0xff]
    %v261 = vld [vmem:[#allocation6 + $0x40] sm:$0xff]
    %v262 = vld [vmem:[#allocation6 + $0x48] sm:$0xff]
    %v263 = vld [vmem:[#allocation6 + $0x50] sm:$0xff]
    %v264 = vld [vmem:[#allocation6 + $0x58] sm:$0xff]
    %v265 = vld [vmem:[#allocation6 + $0x60] sm:$0xff]
    %v266 = vld [vmem:[#allocation6 + $0x68] sm:$0xff]
    %v267 = vld [vmem:[#allocation6 + $0x70] sm:$0xff]
    %v268 = vld [vmem:[#allocation6 + $0x78] sm:$0xff]
    %v269 = vld [vmem:[#allocation6 + $0x80] sm:$0xff]
    %v270 = vld [vmem:[#allocation6 + $0x88] sm:$0xff]
    %v271 = vld [vmem:[#allocation6 + $0x90] sm:$0xff]
    %v272 = vld [vmem:[#allocation6 + $0x98] sm:$0xff]
    %v273 = vld [vmem:[#allocation6 + $0xa0] sm:$0xff]
    %v274 = vld [vmem:[#allocation6 + $0xa8] sm:$0xff]
    %v275 = vld [vmem:[#allocation6 + $0xb0] sm:$0xff]
    %v276 = vld [vmem:[#allocation6 + $0xb8] sm:$0xff]
    %v277 = vld [vmem:[#allocation6 + $0xc0] sm:$0xff]
    %v278 = vld [vmem:[#allocation6 + $0xc8] sm:$0xff]
    %v279 = vld [vmem:[#allocation6 + $0xd0] sm:$0xff]
    %v280 = vld [vmem:[#allocation6 + $0xd8] sm:$0xff]
    %v281 = vld [vmem:[#allocation6 + $0xe0] sm:$0xff]
    %v282 = vld [vmem:[#allocation6 + $0xe8] sm:$0xff]
    %v283 = vld [vmem:[#allocation6 + $0xf0] sm:$0xff]
    %v284 = vld [vmem:[#allocation6 + $0xf8] sm:$0xff]
    %v285 = vld [vmem:[#allocation6 + $0x100] sm:$0xff]
    %v286 = vld [vmem:[#allocation6 + $0x108] sm:$0xff]
    %v287 = vld [vmem:[#allocation6 + $0x110] sm:$0xff]
    %v288 = vld [vmem:[#allocation6 + $0x118] sm:$0xff]
    %v289 = vld [vmem:[#allocation6 + $0x120] sm:$0xff]
    %v290 = vld [vmem:[#allocation6 + $0x128] sm:$0xff]
    %v291 = vld [vmem:[#allocation6 + $0x130] sm:$0xff]
    %v292 = vld [vmem:[#allocation6 + $0x138] sm:$0xff]
    %v293 = vld [vmem:[#allocation6 + $0x140] sm:$0xff]
    %v294 = vld [vmem:[#allocation6 + $0x148] sm:$0xff]
    %v295 = vld [vmem:[#allocation6 + $0x150] sm:$0xff]
    %v296 = vld [vmem:[#allocation6 + $0x158] sm:$0xff]
    %v297 = vld [vmem:[#allocation6 + $0x160] sm:$0xff]
    %v298 = vld [vmem:[#allocation6 + $0x168] sm:$0xff]
    %v299 = vld [vmem:[#allocation6 + $0x170] sm:$0xff]
    %v300 = vld [vmem:[#allocation6 + $0x178] sm:$0xff]
    %v301 = vld [vmem:[#allocation6 + $0x180] sm:$0xff]
    %v302 = vld [vmem:[#allocation6 + $0x188] sm:$0xff]
    %v303 = vld [vmem:[#allocation6 + $0x190] sm:$0xff]
    %v304 = vld [vmem:[#allocation6 + $0x198] sm:$0xff]
    %v305 = vld [vmem:[#allocation6 + $0x1a0] sm:$0xff]
    %v306 = vld [vmem:[#allocation6 + $0x1a8] sm:$0xff]
    %v307 = vld [vmem:[#allocation6 + $0x1b0] sm:$0xff]
    %v308 = vld [vmem:[#allocation6 + $0x1b8] sm:$0xff]
    %v309 = vld [vmem:[#allocation6 + $0x1c0] sm:$0xff]
    %v310 = vld [vmem:[#allocation6 + $0x1c8] sm:$0xff]
    %v311 = vld [vmem:[#allocation6 + $0x1d0] sm:$0xff]
    %v312 = vld [vmem:[#allocation6 + $0x1d8] sm:$0xff]
    %v313 = vld [vmem:[#allocation6 + $0x1e0] sm:$0xff]
    %v314 = vld [vmem:[#allocation6 + $0x1e8] sm:$0xff]
    %v315 = vld [vmem:[#allocation6 + $0x1f0] sm:$0xff]
    %v316 = vld [vmem:[#allocation6 + $0x1f8] sm:$0xff]
    %v317 = vld [vmem:[%s4] sm:$0x3]
    %v319 = vlaneseq
    %v320 = vshrl.u32 %v319, 7
    %v321 = vsub.s32 0, %v320
    %v322 = vrot.slane %v317, %v321
    %v323 = vlaneseq
    %v324 = vshrl.u32 %v323, 7
    %v325 = vsub.s32 1, %v324
    %v326 = vrot.slane %v317, %v325
    %v393 = vunpack.c.l.b16 %v253
    %v394 = vunpack.c.h.b16 %v253
    %v395 = vunpack.c.l.b16 %v254
    %v396 = vunpack.c.h.b16 %v254
    %v397 = vunpack.c.l.b16 %v255
    %v398 = vunpack.c.h.b16 %v255
    %v399 = vunpack.c.l.b16 %v256
    %v400 = vunpack.c.h.b16 %v256
    %v401 = vunpack.c.l.b16 %v257
    %v402 = vunpack.c.h.b16 %v257
    %v403 = vunpack.c.l.b16 %v258
    %v404 = vunpack.c.h.b16 %v258
    %v405 = vunpack.c.l.b16 %v259
    %v406 = vunpack.c.h.b16 %v259
    %v407 = vunpack.c.l.b16 %v260
    %v408 = vunpack.c.h.b16 %v260
    %v409 = vunpack.c.l.b16 %v261
    %v410 = vunpack.c.h.b16 %v261
    %v411 = vunpack.c.l.b16 %v262
    %v412 = vunpack.c.h.b16 %v262
    %v413 = vunpack.c.l.b16 %v263
    %v414 = vunpack.c.h.b16 %v263
    %v415 = vunpack.c.l.b16 %v264
    %v416 = vunpack.c.h.b16 %v264
    %v417 = vunpack.c.l.b16 %v265
    %v418 = vunpack.c.h.b16 %v265
    %v419 = vunpack.c.l.b16 %v266
    %v420 = vunpack.c.h.b16 %v266
    %v421 = vunpack.c.l.b16 %v267
    %v422 = vunpack.c.h.b16 %v267
    %v423 = vunpack.c.l.b16 %v268
    %v424 = vunpack.c.h.b16 %v268
    %v425 = vunpack.c.l.b16 %v269
    %v426 = vunpack.c.h.b16 %v269
    %v427 = vunpack.c.l.b16 %v270
    %v428 = vunpack.c.h.b16 %v270
    %v429 = vunpack.c.l.b16 %v271
    %v430 = vunpack.c.h.b16 %v271
    %v431 = vunpack.c.l.b16 %v272
    %v432 = vunpack.c.h.b16 %v272
    %v433 = vunpack.c.l.b16 %v273
    %v434 = vunpack.c.h.b16 %v273
    %v435 = vunpack.c.l.b16 %v274
    %v436 = vunpack.c.h.b16 %v274
    %v437 = vunpack.c.l.b16 %v275
    %v438 = vunpack.c.h.b16 %v275
    %v439 = vunpack.c.l.b16 %v276
    %v440 = vunpack.c.h.b16 %v276
    %v441 = vunpack.c.l.b16 %v277
    %v442 = vunpack.c.h.b16 %v277
    %v443 = vunpack.c.l.b16 %v278
    %v444 = vunpack.c.h.b16 %v278
    %v445 = vunpack.c.l.b16 %v279
    %v446 = vunpack.c.h.b16 %v279
    %v447 = vunpack.c.l.b16 %v280
    %v448 = vunpack.c.h.b16 %v280
    %v449 = vunpack.c.l.b16 %v281
    %v450 = vunpack.c.h.b16 %v281
    %v451 = vunpack.c.l.b16 %v282
    %v452 = vunpack.c.h.b16 %v282
    %v453 = vunpack.c.l.b16 %v283
    %v454 = vunpack.c.h.b16 %v283
    %v455 = vunpack.c.l.b16 %v284
    %v456 = vunpack.c.h.b16 %v284
    %v457 = vunpack.c.l.b16 %v285
    %v458 = vunpack.c.h.b16 %v285
    %v459 = vunpack.c.l.b16 %v286
    %v460 = vunpack.c.h.b16 %v286
    %v461 = vunpack.c.l.b16 %v287
    %v462 = vunpack.c.h.b16 %v287
    %v463 = vunpack.c.l.b16 %v288
    %v464 = vunpack.c.h.b16 %v288
    %v465 = vunpack.c.l.b16 %v289
    %v466 = vunpack.c.h.b16 %v289
    %v467 = vunpack.c.l.b16 %v290
    %v468 = vunpack.c.h.b16 %v290
    %v469 = vunpack.c.l.b16 %v291
    %v470 = vunpack.c.h.b16 %v291
    %v471 = vunpack.c.l.b16 %v292
    %v472 = vunpack.c.h.b16 %v292
    %v473 = vunpack.c.l.b16 %v293
    %v474 = vunpack.c.h.b16 %v293
    %v475 = vunpack.c.l.b16 %v294
    %v476 = vunpack.c.h.b16 %v294
    %v477 = vunpack.c.l.b16 %v295
    %v478 = vunpack.c.h.b16 %v295
    %v479 = vunpack.c.l.b16 %v296
    %v480 = vunpack.c.h.b16 %v296
    %v481 = vunpack.c.l.b16 %v297
    %v482 = vunpack.c.h.b16 %v297
    %v483 = vunpack.c.l.b16 %v298
    %v484 = vunpack.c.h.b16 %v298
    %v485 = vunpack.c.l.b16 %v299
    %v486 = vunpack.c.h.b16 %v299
    %v487 = vunpack.c.l.b16 %v300
    %v488 = vunpack.c.h.b16 %v300
    %v489 = vunpack.c.l.b16 %v301
    %v490 = vunpack.c.h.b16 %v301
    %v491 = vunpack.c.l.b16 %v302
    %v492 = vunpack.c.h.b16 %v302
    %v493 = vunpack.c.l.b16 %v303
    %v494 = vunpack.c.h.b16 %v303
    %v495 = vunpack.c.l.b16 %v304
    %v496 = vunpack.c.h.b16 %v304
    %v497 = vunpack.c.l.b16 %v305
    %v498 = vunpack.c.h.b16 %v305
    %v499 = vunpack.c.l.b16 %v306
    %v500 = vunpack.c.h.b16 %v306
    %v501 = vunpack.c.l.b16 %v307
    %v502 = vunpack.c.h.b16 %v307
    %v503 = vunpack.c.l.b16 %v308
    %v504 = vunpack.c.h.b16 %v308
    %v505 = vunpack.c.l.b16 %v309
    %v506 = vunpack.c.h.b16 %v309
    %v507 = vunpack.c.l.b16 %v310
    %v508 = vunpack.c.h.b16 %v310
    %v509 = vunpack.c.l.b16 %v311
    %v510 = vunpack.c.h.b16 %v311
    %v511 = vunpack.c.l.b16 %v312
    %v512 = vunpack.c.h.b16 %v312
    %v513 = vunpack.c.l.b16 %v313
    %v514 = vunpack.c.h.b16 %v313
    %v515 = vunpack.c.l.b16 %v314
    %v516 = vunpack.c.h.b16 %v314
    %v517 = vunpack.c.l.b16 %v315
    %v518 = vunpack.c.h.b16 %v315
    %v519 = vunpack.c.l.b16 %v316
    %v520 = vunpack.c.h.b16 %v316
    %v521 = vpack.c.b16 %v395, %v393
    %v522 = vpack.c.b16 %v396, %v394
    %v523 = vpack.c.b16 %v399, %v397
    %v524 = vpack.c.b16 %v400, %v398
    %v525 = vpack.c.b16 %v403, %v401
    %v526 = vpack.c.b16 %v404, %v402
    %v527 = vpack.c.b16 %v407, %v405
    %v528 = vpack.c.b16 %v408, %v406
    %v529 = vpack.c.b16 %v411, %v409
    %v530 = vpack.c.b16 %v412, %v410
    %v531 = vpack.c.b16 %v415, %v413
    %v532 = vpack.c.b16 %v416, %v414
    %v533 = vpack.c.b16 %v419, %v417
    %v534 = vpack.c.b16 %v420, %v418
    %v535 = vpack.c.b16 %v423, %v421
    %v536 = vpack.c.b16 %v424, %v422
    %v537 = vpack.c.b16 %v427, %v425
    %v538 = vpack.c.b16 %v428, %v426
    %v539 = vpack.c.b16 %v431, %v429
    %v540 = vpack.c.b16 %v432, %v430
    %v541 = vpack.c.b16 %v435, %v433
    %v542 = vpack.c.b16 %v436, %v434
    %v543 = vpack.c.b16 %v439, %v437
    %v544 = vpack.c.b16 %v440, %v438
    %v545 = vpack.c.b16 %v443, %v441
    %v546 = vpack.c.b16 %v444, %v442
    %v547 = vpack.c.b16 %v447, %v445
    %v548 = vpack.c.b16 %v448, %v446
    %v549 = vpack.c.b16 %v451, %v449
    %v550 = vpack.c.b16 %v452, %v450
    %v551 = vpack.c.b16 %v455, %v453
    %v552 = vpack.c.b16 %v456, %v454
    %v553 = vpack.c.b16 %v459, %v457
    %v554 = vpack.c.b16 %v460, %v458
    %v555 = vpack.c.b16 %v463, %v461
    %v556 = vpack.c.b16 %v464, %v462
    %v557 = vpack.c.b16 %v467, %v465
    %v558 = vpack.c.b16 %v468, %v466
    %v559 = vpack.c.b16 %v471, %v469
    %v560 = vpack.c.b16 %v472, %v470
    %v561 = vpack.c.b16 %v475, %v473
    %v562 = vpack.c.b16 %v476, %v474
    %v563 = vpack.c.b16 %v479, %v477
    %v564 = vpack.c.b16 %v480, %v478
    %v565 = vpack.c.b16 %v483, %v481
    %v566 = vpack.c.b16 %v484, %v482
    %v567 = vpack.c.b16 %v487, %v485
    %v568 = vpack.c.b16 %v488, %v486
    %v569 = vpack.c.b16 %v491, %v489
    %v570 = vpack.c.b16 %v492, %v490
    %v571 = vpack.c.b16 %v495, %v493
    %v572 = vpack.c.b16 %v496, %v494
    %v573 = vpack.c.b16 %v499, %v497
    %v574 = vpack.c.b16 %v500, %v498
    %v575 = vpack.c.b16 %v503, %v501
    %v576 = vpack.c.b16 %v504, %v502
    %v577 = vpack.c.b16 %v507, %v505
    %v578 = vpack.c.b16 %v508, %v506
    %v579 = vpack.c.b16 %v511, %v509
    %v580 = vpack.c.b16 %v512, %v510
    %v581 = vpack.c.b16 %v515, %v513
    %v582 = vpack.c.b16 %v516, %v514
    %v583 = vpack.c.b16 %v519, %v517
    %v584 = vpack.c.b16 %v520, %v518
    %649 = vmatprep.subr.bf16.mxu0 %v522
    %650 = vmatpush1.bf16.msra.mxu0 %v521
    %651 = vmatprep.subr.bf16.mxu0 %v524
    %652 = vmatpush1.bf16.msra.mxu0 %v523
    %653 = vmatprep.subr.bf16.mxu0 %v526
    %654 = vmatpush1.bf16.msra.mxu0 %v525
    %655 = vmatprep.subr.bf16.mxu0 %v528
    %656 = vmatpush1.bf16.msra.mxu0 %v527
    %657 = vmatprep.subr.bf16.mxu0 %v530
    %658 = vmatpush1.bf16.msra.mxu0 %v529
    %659 = vmatprep.subr.bf16.mxu0 %v532
    %660 = vmatpush1.bf16.msra.mxu0 %v531
    %661 = vmatprep.subr.bf16.mxu0 %v534
    %662 = vmatpush1.bf16.msra.mxu0 %v533
    %663 = vmatprep.subr.bf16.mxu0 %v536
    %664 = vmatpush1.bf16.msra.mxu0 %v535
    %665 = vmatprep.subr.bf16.mxu0 %v538
    %666 = vmatpush1.bf16.msra.mxu0 %v537
    %667 = vmatprep.subr.bf16.mxu0 %v540
    %668 = vmatpush1.bf16.msra.mxu0 %v539
    %669 = vmatprep.subr.bf16.mxu0 %v542
    %670 = vmatpush1.bf16.msra.mxu0 %v541
    %671 = vmatprep.subr.bf16.mxu0 %v544
    %672 = vmatpush1.bf16.msra.mxu0 %v543
    %673 = vmatprep.subr.bf16.mxu0 %v546
    %674 = vmatpush1.bf16.msra.mxu0 %v545
    %675 = vmatprep.subr.bf16.mxu0 %v548
    %676 = vmatpush1.bf16.msra.mxu0 %v547
    %677 = vmatprep.subr.bf16.mxu0 %v550
    %678 = vmatpush1.bf16.msra.mxu0 %v549
    %679 = vmatprep.subr.bf16.mxu0 %v552
    %680 = vmatpush1.bf16.msra.mxu0 %v551
    %681 = vmatprep.mubr.bf16.mxu0 %v250
    %682 = vmatmul.mubr.bf16.gmra.mrb[0].mxu0 %v249
    %v683 = vpop.f32.mrb[0].mxu0
    %v684 = vadd.f32 %v322, %v683
    %v685 = vpop.f32.mrb[0].mxu0
    %v686 = vadd.f32 %v326, %v685
    %v687 = vpop.f32.mrb[0].mxu0
    %v688 = vpop.f32.mrb[0].mxu0
    %689 = vdwg.mxu0
    %690 = vmatprep.subr.bf16.mxu0 %v554
    %691 = vmatpush1.bf16.msra.mxu0 %v553
    %692 = vmatprep.subr.bf16.mxu0 %v556
    %693 = vmatpush1.bf16.msra.mxu0 %v555
    %694 = vmatprep.subr.bf16.mxu0 %v558
    %695 = vmatpush1.bf16.msra.mxu0 %v557
    %696 = vmatprep.subr.bf16.mxu0 %v560
    %697 = vmatpush1.bf16.msra.mxu0 %v559
    %698 = vmatprep.subr.bf16.mxu0 %v562
    %699 = vmatpush1.bf16.msra.mxu0 %v561
    %700 = vmatprep.subr.bf16.mxu0 %v564
    %701 = vmatpush1.bf16.msra.mxu0 %v563
    %702 = vmatprep.subr.bf16.mxu0 %v566
    %703 = vmatpush1.bf16.msra.mxu0 %v565
    %704 = vmatprep.subr.bf16.mxu0 %v568
    %705 = vmatpush1.bf16.msra.mxu0 %v567
    %706 = vmatprep.subr.bf16.mxu0 %v570
    %707 = vmatpush1.bf16.msra.mxu0 %v569
    %708 = vmatprep.subr.bf16.mxu0 %v572
    %709 = vmatpush1.bf16.msra.mxu0 %v571
    %710 = vmatprep.subr.bf16.mxu0 %v574
    %711 = vmatpush1.bf16.msra.mxu0 %v573
    %712 = vmatprep.subr.bf16.mxu0 %v576
    %713 = vmatpush1.bf16.msra.mxu0 %v575
    %714 = vmatprep.subr.bf16.mxu0 %v578
    %715 = vmatpush1.bf16.msra.mxu0 %v577
    %716 = vmatprep.subr.bf16.mxu0 %v580
    %717 = vmatpush1.bf16.msra.mxu0 %v579
    %718 = vmatprep.subr.bf16.mxu0 %v582
    %719 = vmatpush1.bf16.msra.mxu0 %v581
    %720 = vmatprep.subr.bf16.mxu0 %v584
    %721 = vmatpush1.bf16.msra.mxu0 %v583
    %722 = vmatprep.mubr.bf16.mxu0 %v252
    %723 = vmatmul.mubr.bf16.gmra.mrb[0].mxu0 %v251
    %v724 = vpop.f32.mrb[0].mxu0
    %v725 = vadd.f32 %v684, %v724
    %v726 = vpop.f32.mrb[0].mxu0
    %v727 = vadd.f32 %v686, %v726
    %v728 = vpop.f32.mrb[0].mxu0
    %v729 = vpop.f32.mrb[0].mxu0
    %730 = vdwg.mxu0
    %v731 = vmul.f32 %v725, 0.2
    %v732 = vmul.f32 %v727, 0.2
    %v733 = vmax.f32 %v725, %v731
    %v734 = vmax.f32 %v727, %v732
    %v735 = vpack.c.bf16 %v733, %v733
    %v736 = vpack.c.bf16 %v734, %v734
    %v737 = vld [vmem:[#allocation7] sm:$0xf]
    %v738 = vld [vmem:[#allocation7 + $0x4] sm:$0xf]
    %v739 = vld [vmem:[#allocation7 + $0x8] sm:$0xf]
    %v740 = vld [vmem:[#allocation7 + $0xc] sm:$0xf]
    %v741 = vld [vmem:[#allocation7 + $0x10] sm:$0xf]
    %v742 = vld [vmem:[#allocation7 + $0x14] sm:$0xf]
    %v743 = vld [vmem:[#allocation7 + $0x18] sm:$0xf]
    %v744 = vld [vmem:[#allocation7 + $0x1c] sm:$0xf]
    %v745 = vld [vmem:[#allocation7 + $0x20] sm:$0xf]
    %v746 = vld [vmem:[#allocation7 + $0x24] sm:$0xf]
    %v747 = vld [vmem:[#allocation7 + $0x28] sm:$0xf]
    %v748 = vld [vmem:[#allocation7 + $0x2c] sm:$0xf]
    %v749 = vld [vmem:[#allocation7 + $0x30] sm:$0xf]
    %v750 = vld [vmem:[#allocation7 + $0x34] sm:$0xf]
    %v751 = vld [vmem:[#allocation7 + $0x38] sm:$0xf]
    %v752 = vld [vmem:[#allocation7 + $0x3c] sm:$0xf]
    %v753 = vld [vmem:[#allocation7 + $0x40] sm:$0xf]
    %v754 = vld [vmem:[#allocation7 + $0x44] sm:$0xf]
    %v755 = vld [vmem:[#allocation7 + $0x48] sm:$0xf]
    %v756 = vld [vmem:[#allocation7 + $0x4c] sm:$0xf]
    %v757 = vld [vmem:[#allocation7 + $0x50] sm:$0xf]
    %v758 = vld [vmem:[#allocation7 + $0x54] sm:$0xf]
    %v759 = vld [vmem:[#allocation7 + $0x58] sm:$0xf]
    %v760 = vld [vmem:[#allocation7 + $0x5c] sm:$0xf]
    %v761 = vld [vmem:[#allocation7 + $0x60] sm:$0xf]
    %v762 = vld [vmem:[#allocation7 + $0x64] sm:$0xf]
    %v763 = vld [vmem:[#allocation7 + $0x68] sm:$0xf]
    %v764 = vld [vmem:[#allocation7 + $0x6c] sm:$0xf]
    %v765 = vld [vmem:[#allocation7 + $0x70] sm:$0xf]
    %v766 = vld [vmem:[#allocation7 + $0x74] sm:$0xf]
    %v767 = vld [vmem:[#allocation7 + $0x78] sm:$0xf]
    %v768 = vld [vmem:[#allocation7 + $0x7c] sm:$0xf]
    %v769 = vld [vmem:[%s6] sm:$0x1]
    %v771 = vlaneseq
    %v772 = vshrl.u32 %v771, 7
    %v773 = vsub.s32 0, %v772
    %v774 = vrot.slane %v769, %v773
    %v808 = vunpack.c.l.b16 %v737
    %v809 = vunpack.c.l.b16 %v738
    %v810 = vunpack.c.l.b16 %v739
    %v811 = vunpack.c.l.b16 %v740
    %v812 = vunpack.c.l.b16 %v741
    %v813 = vunpack.c.l.b16 %v742
    %v814 = vunpack.c.l.b16 %v743
    %v815 = vunpack.c.l.b16 %v744
    %v816 = vunpack.c.l.b16 %v745
    %v817 = vunpack.c.l.b16 %v746
    %v818 = vunpack.c.l.b16 %v747
    %v819 = vunpack.c.l.b16 %v748
    %v820 = vunpack.c.l.b16 %v749
    %v821 = vunpack.c.l.b16 %v750
    %v822 = vunpack.c.l.b16 %v751
    %v823 = vunpack.c.l.b16 %v752
    %v824 = vunpack.c.l.b16 %v753
    %v825 = vunpack.c.l.b16 %v754
    %v826 = vunpack.c.l.b16 %v755
    %v827 = vunpack.c.l.b16 %v756
    %v828 = vunpack.c.l.b16 %v757
    %v829 = vunpack.c.l.b16 %v758
    %v830 = vunpack.c.l.b16 %v759
    %v831 = vunpack.c.l.b16 %v760
    %v832 = vunpack.c.l.b16 %v761
    %v833 = vunpack.c.l.b16 %v762
    %v834 = vunpack.c.l.b16 %v763
    %v835 = vunpack.c.l.b16 %v764
    %v836 = vunpack.c.l.b16 %v765
    %v837 = vunpack.c.l.b16 %v766
    %v838 = vunpack.c.l.b16 %v767
    %v839 = vunpack.c.l.b16 %v768
    %v840 = vpack.c.b16 %v809, %v808
    %v841 = vpack.c.b16 %v811, %v810
    %v842 = vpack.c.b16 %v813, %v812
    %v843 = vpack.c.b16 %v815, %v814
    %v844 = vpack.c.b16 %v817, %v816
    %v845 = vpack.c.b16 %v819, %v818
    %v846 = vpack.c.b16 %v821, %v820
    %v847 = vpack.c.b16 %v823, %v822
    %v848 = vpack.c.b16 %v825, %v824
    %v849 = vpack.c.b16 %v827, %v826
    %v850 = vpack.c.b16 %v829, %v828
    %v851 = vpack.c.b16 %v831, %v830
    %v852 = vpack.c.b16 %v833, %v832
    %v853 = vpack.c.b16 %v835, %v834
    %v854 = vpack.c.b16 %v837, %v836
    %v855 = vpack.c.b16 %v839, %v838
    %872 = vmatprep.subr.bf16.mxu0 0
    %873 = vmatpush1.bf16.msra.mxu0 %v840
    %874 = vmatprep.subr.bf16.mxu0 0
    %875 = vmatpush1.bf16.msra.mxu0 %v841
    %876 = vmatprep.subr.bf16.mxu0 0
    %877 = vmatpush1.bf16.msra.mxu0 %v842
    %878 = vmatprep.subr.bf16.mxu0 0
    %879 = vmatpush1.bf16.msra.mxu0 %v843
    %880 = vmatprep.subr.bf16.mxu0 0
    %881 = vmatpush1.bf16.msra.mxu0 %v844
    %882 = vmatprep.subr.bf16.mxu0 0
    %883 = vmatpush1.bf16.msra.mxu0 %v845
    %884 = vmatprep.subr.bf16.mxu0 0
    %885 = vmatpush1.bf16.msra.mxu0 %v846
    %886 = vmatprep.subr.bf16.mxu0 0
    %887 = vmatpush1.bf16.msra.mxu0 %v847
    %888 = vmatprep.subr.bf16.mxu0 0
    %889 = vmatpush1.bf16.msra.mxu0 %v848
    %890 = vmatprep.subr.bf16.mxu0 0
    %891 = vmatpush1.bf16.msra.mxu0 %v849
    %892 = vmatprep.subr.bf16.mxu0 0
    %893 = vmatpush1.bf16.msra.mxu0 %v850
    %894 = vmatprep.subr.bf16.mxu0 0
    %895 = vmatpush1.bf16.msra.mxu0 %v851
    %896 = vmatprep.subr.bf16.mxu0 0
    %897 = vmatpush1.bf16.msra.mxu0 %v852
    %898 = vmatprep.subr.bf16.mxu0 0
    %899 = vmatpush1.bf16.msra.mxu0 %v853
    %900 = vmatprep.subr.bf16.mxu0 0
    %901 = vmatpush1.bf16.msra.mxu0 %v854
    %902 = vmatprep.subr.bf16.mxu0 0
    %903 = vmatpush1.bf16.msra.mxu0 %v855
    %904 = vmatprep.mubr.bf16.mxu0 %v736
    %905 = vmatmul.mubr.bf16.gmra.mrb[0].mxu0 %v735
    %v906 = vpop.f32.mrb[0].mxu0
    %v907 = vadd.f32 %v774, %v906
    %v908 = vpop.f32.mrb[0].mxu0
    %v909 = vpop.f32.mrb[0].mxu0
    %v910 = vpop.f32.mrb[0].mxu0
    %911 = vdwg.mxu0
    %v912 = vmul.f32 %v907, 0.2
    %v913 = vmax.f32 %v907, %v912
    %v914 = vpack.c.bf16 %v913, %v913
    %v915 = vld [vmem:[#allocation9] sm:$0xf]
    %v916 = vld [vmem:[#allocation9 + $0x4] sm:$0xf]
    %v917 = vld [vmem:[#allocation9 + $0x8] sm:$0xf]
    %v918 = vld [vmem:[#allocation9 + $0xc] sm:$0xf]
    %v919 = vld [vmem:[#allocation9 + $0x10] sm:$0xf]
    %v920 = vld [vmem:[#allocation9 + $0x14] sm:$0xf]
    %v921 = vld [vmem:[#allocation9 + $0x18] sm:$0xf]
    %v922 = vld [vmem:[#allocation9 + $0x1c] sm:$0xf]
    %v923 = vld [vmem:[#allocation9 + $0x20] sm:$0xf]
    %v924 = vld [vmem:[#allocation9 + $0x24] sm:$0xf]
    %v925 = vld [vmem:[#allocation9 + $0x28] sm:$0xf]
    %v926 = vld [vmem:[#allocation9 + $0x2c] sm:$0xf]
    %v927 = vld [vmem:[#allocation9 + $0x30] sm:$0xf]
    %v928 = vld [vmem:[#allocation9 + $0x34] sm:$0xf]
    %v929 = vld [vmem:[#allocation9 + $0x38] sm:$0xf]
    %v930 = vld [vmem:[#allocation9 + $0x3c] sm:$0xf]
    %v931 = vld [vmem:[%s8] sm:$0x1]
    %v933 = vlaneseq
    %v934 = vshrl.u32 %v933, 7
    %v935 = vsub.s32 0, %v934
    %v936 = vrot.slane %v931, %v935
    %v954 = vunpack.c.l.b16 %v915
    %v955 = vunpack.c.l.b16 %v916
    %v956 = vunpack.c.l.b16 %v917
    %v957 = vunpack.c.l.b16 %v918
    %v958 = vunpack.c.l.b16 %v919
    %v959 = vunpack.c.l.b16 %v920
    %v960 = vunpack.c.l.b16 %v921
    %v961 = vunpack.c.l.b16 %v922
    %v962 = vunpack.c.l.b16 %v923
    %v963 = vunpack.c.l.b16 %v924
    %v964 = vunpack.c.l.b16 %v925
    %v965 = vunpack.c.l.b16 %v926
    %v966 = vunpack.c.l.b16 %v927
    %v967 = vunpack.c.l.b16 %v928
    %v968 = vunpack.c.l.b16 %v929
    %v969 = vunpack.c.l.b16 %v930
    %v970 = vpack.c.b16 %v955, %v954
    %v971 = vpack.c.b16 %v957, %v956
    %v972 = vpack.c.b16 %v959, %v958
    %v973 = vpack.c.b16 %v961, %v960
    %v974 = vpack.c.b16 %v963, %v962
    %v975 = vpack.c.b16 %v965, %v964
    %v976 = vpack.c.b16 %v967, %v966
    %v977 = vpack.c.b16 %v969, %v968
    %986 = vmatprep.subr.bf16.mxu0 0
    %987 = vmatpush1.bf16.msra.mxu0 %v970
    %988 = vmatprep.subr.bf16.mxu0 0
    %989 = vmatpush1.bf16.msra.mxu0 %v971
    %990 = vmatprep.subr.bf16.mxu0 0
    %991 = vmatpush1.bf16.msra.mxu0 %v972
    %992 = vmatprep.subr.bf16.mxu0 0
    %993 = vmatpush1.bf16.msra.mxu0 %v973
    %994 = vmatprep.subr.bf16.mxu0 0
    %995 = vmatpush1.bf16.msra.mxu0 %v974
    %996 = vmatprep.subr.bf16.mxu0 0
    %997 = vmatpush1.bf16.msra.mxu0 %v975
    %998 = vmatprep.subr.bf16.mxu0 0
    %999 = vmatpush1.bf16.msra.mxu0 %v976
    %1000 = vmatprep.subr.bf16.mxu0 0
    %1001 = vmatpush1.bf16.msra.mxu0 %v977
    %1002 = vmatprep.subr.bf16.mxu0 0
    %1003 = vmatpush1.bf16.msra.mxu0 0
    %1004 = vmatprep.subr.bf16.mxu0 0
    %1005 = vmatpush1.bf16.msra.mxu0 0
    %1006 = vmatprep.subr.bf16.mxu0 0
    %1007 = vmatpush1.bf16.msra.mxu0 0
    %1008 = vmatprep.subr.bf16.mxu0 0
    %1009 = vmatpush1.bf16.msra.mxu0 0
    %1010 = vmatprep.subr.bf16.mxu0 0
    %1011 = vmatpush1.bf16.msra.mxu0 0
    %1012 = vmatprep.subr.bf16.mxu0 0
    %1013 = vmatpush1.bf16.msra.mxu0 0
    %1014 = vmatprep.subr.bf16.mxu0 0
    %1015 = vmatpush1.bf16.msra.mxu0 0
    %1016 = vmatprep.subr.bf16.mxu0 0
    %1017 = vmatpush1.bf16.msra.mxu0 0
    %1018 = vmatprep.mubr.bf16.mxu0 0
    %1019 = vmatmul.mubr.bf16.gmra.mrb[0].mxu0 %v914
    %v1020 = vpop.f32.mrb[0].mxu0
    %v1021 = vadd.f32 %v936, %v1020
    %v1022 = vpop.f32.mrb[0].mxu0
    %v1023 = vpop.f32.mrb[0].mxu0
    %v1024 = vpop.f32.mrb[0].mxu0
    %1025 = vdwg.mxu0
    %v1026 = vmul.f32 %v1021, 0.2
    %v1027 = vmax.f32 %v1021, %v1026
    %vm1028 = vcmask 7168
    %1029 = vst.msk [vmem:[%s9] sm:$0xff] %vm1028, %v1027
    // Predicated region
    $region58: #{tpu_custom_call.1} parent=1 // pred_check
      _
    $region59: #{tpu_custom_call.1} parent=1 // pred_check_branch
      %1031 = sbr.rel (0) target = $region61
    $region60: #{tpu_custom_call.1} parent=1 // pred_region
      _
    $region61: #{tpu_custom_call.1} parent=1 // pred_fallthru
      _
    // Predicated region
    $region62: #{tpu_custom_call.1} parent=1 // pred_check
      _
    $region63: #{tpu_custom_call.1} parent=1 // pred_check_branch
      %1033 = sbr.rel (0) target = $region65
    $region64: #{tpu_custom_call.1} parent=1 // pred_region
      _
    $region65: #{tpu_custom_call.1} parent=1 // pred_fallthru
      _
    %1034 = vsyncpa [#allocation3], 1
    %1035 = vsyncpa [#allocation5], 1
    %1036 = vsyncpa [#allocation8], 1

</llo_original>
